<compile_context>
chip_gen: v6e
topology: v6e:2x2x1
jax: 0.10.0
libtpu: 0.0.40
codegen_flags: <defaults>
</compile_context>

<pallas_src>
import jax
import jax.numpy as jnp
from jax.experimental import pallas as pl
from jax.experimental.pallas import tpu as pltpu

IN_FEATURES = 100
OUT_FEATURES = 100
SUBLANE = 8  # f32 sublane count: batch tile kept a multiple of this


def _round_up(n, m):
    return ((n + m - 1) // m) * m


def _fused_linear_kernel(x_ref, w_ref, b_ref, o_ref):
    # Single MXU matmul (K=100, N=100; Mosaic handles non-128 contraction
    # in-kernel) + single VPU broadcast bias add.
    o_ref[...] = (
        jnp.dot(x_ref[...], w_ref[...], preferred_element_type=jnp.float32)
        + b_ref[...]
    ).astype(o_ref.dtype)


def _fused_forward(x, w_comb, b_comb, *, block_b=1024):
    """out = x @ w_comb + b_comb with x: [B, IN], w_comb: [IN, OUT], b_comb: [1, OUT]."""
    B = x.shape[0]

    # Batch tile: multiple of 8, at most block_b, and small enough that the
    # parallel grid has >=2 blocks when B allows (v7x megacore sharding).
    tm = min(
        block_b,
        _round_up(B, SUBLANE),
        _round_up(pl.cdiv(B, 2), SUBLANE),
    )
    tm = max(tm, SUBLANE)
    grid = (pl.cdiv(B, tm),)

    return pl.pallas_call(
        _fused_linear_kernel,
        out_shape=jax.ShapeDtypeStruct((B, OUT_FEATURES), x.dtype),
        grid_spec=pltpu.PrefetchScalarGridSpec(
            num_scalar_prefetch=0,
            grid=grid,
            in_specs=[
                # x: batch-tiled, full (100-wide) last dim — no lane padding.
                pl.BlockSpec((tm, IN_FEATURES), lambda i: (i, 0)),
                # folded weight: resident in VMEM across the whole grid.
                pl.BlockSpec((IN_FEATURES, OUT_FEATURES), lambda i: (0, 0)),
                # folded bias: resident.
                pl.BlockSpec((1, OUT_FEATURES), lambda i: (0, 0)),
            ],
            out_specs=pl.BlockSpec((tm, OUT_FEATURES), lambda i: (i, 0)),
        ),
        compiler_params=pltpu.CompilerParams(
            dimension_semantics=("parallel",),
        ),
        cost_estimate=pl.CostEstimate(
            flops=2 * B * IN_FEATURES * OUT_FEATURES,
            transcendentals=0,
            bytes_accessed=4
            * (B * IN_FEATURES + IN_FEATURES * OUT_FEATURES + OUT_FEATURES + B * OUT_FEATURES),
        ),
    )(x, w_comb, b_comb)


def simple_module_diff(x, w1_t, b1, w2_t, b2, *, block_b=1024):
    """Forward of SimpleModuleDiff: 2*(x @ W1^T + b1) + (x @ W2^T + b2).

    x: [B, 100]; w*_t: [100, 100] stored transposed ([IN, OUT]); b*: [100].
    Returns [B, 100].
    """
    # Fold the three linears into one (parameter-only ops; fuse under jit and
    # can be hoisted/cached by the caller since weights are static parameters).
    w_comb = 2.0 * w1_t + w2_t                          # [IN, OUT]
    b_comb = (2.0 * b1 + b2).reshape(1, OUT_FEATURES)   # [1, OUT]
    return _fused_forward(x, w_comb, b_comb, block_b=block_b)


def init_params(key):
    """Deterministic init mimicking torch.nn.Linear (uniform +-1/sqrt(fan_in))."""
    k1, k2, k3, k4 = jax.random.split(key, 4)
    bound = 1.0 / jnp.sqrt(jnp.float32(IN_FEATURES))
    # PyTorch weight is [OUT, IN]; we keep the transposed [IN, OUT] layout.
    w1_t = jax.random.uniform(k1, (IN_FEATURES, OUT_FEATURES), jnp.float32,
                              minval=-bound, maxval=bound)
    b1 = jax.random.uniform(k2, (OUT_FEATURES,), jnp.float32,
                            minval=-bound, maxval=bound)
    w2_t = jax.random.uniform(k3, (IN_FEATURES, OUT_FEATURES), jnp.float32,
                              minval=-bound, maxval=bound)
    b2 = jax.random.uniform(k4, (OUT_FEATURES,), jnp.float32,
                            minval=-bound, maxval=bound)
    return w1_t, b1, w2_t, b2


def reference(x, w1_t, b1, w2_t, b2):
    # Literal PyTorch semantics: linear1 twice + linear2 once.
    y1 = x @ w1_t + b1
    y2 = x @ w1_t + b1
    y3 = x @ w2_t + b2
    return y2 + y1 + y3


if __name__ == "__main__":
    key = jax.random.PRNGKey(0)
    kx, kp = jax.random.split(key)
    B = 8
    x = jax.random.normal(kx, (B, IN_FEATURES), jnp.float32)
    w1_t, b1, w2_t, b2 = init_params(kp)

    fwd = jax.jit(simple_module_diff)
    out = fwd(x, w1_t, b1, w2_t, b2)
    out = jax.block_until_ready(out)

    ref = reference(x, w1_t, b1, w2_t, b2)
    assert out.shape == (B, OUT_FEATURES)
    assert jnp.allclose(out, ref, atol=1e-4, rtol=1e-4)
    print("KERNEL_OK")
</pallas_src>

<mosaic_0001>
module attributes {stable_mosaic.version = 11 : i64} {
  func.func @_fused_linear_kernel(%arg0: i32, %arg1: memref<8x100xf32, #tpu.memory_space<vmem>>, %arg2: memref<100x100xf32, #tpu.memory_space<vmem>>, %arg3: memref<1x100xf32, #tpu.memory_space<vmem>>, %arg4: memref<8x100xf32, #tpu.memory_space<vmem>>) attributes {dimension_semantics = [#tpu.dimension_semantics<parallel>], iteration_bounds = array<i64: 1>, scalar_prefetch = 0 : i64, scratch_operands = 0 : i64, tpu.core_type = #tpu.core_type<tc>, window_params = [{transform_indices = @transform_0, window_bounds = array<i64: 8, 100>}, {pipeline_mode = #tpu.pipeline_mode<synchronous>, transform_indices = @transform_1, window_bounds = array<i64: 100, 100>}, {pipeline_mode = #tpu.pipeline_mode<synchronous>, transform_indices = @transform_2, window_bounds = array<i64: 1, 100>}, {transform_indices = @transform_3, window_bounds = array<i64: 8, 100>}]} {
    %c0 = arith.constant 0 : index
    %c0_0 = arith.constant 0 : index
    %0 = vector.load %arg1[%c0, %c0_0] : memref<8x100xf32, #tpu.memory_space<vmem>>, vector<8x100xf32>
    %c0_1 = arith.constant 0 : index
    %c0_2 = arith.constant 0 : index
    %1 = vector.load %arg2[%c0_1, %c0_2] : memref<100x100xf32, #tpu.memory_space<vmem>>, vector<100x100xf32>
    %cst = arith.constant dense<0.000000e+00> : vector<8x100xf32>
    %2 = tpu.matmul %0, %1, %cst {dimension_numbers = #tpu.dot_dimension_numbers<[1], [0], [0], [1], [0, 0, 1, 1], [], []>} : vector<8x100xf32>, vector<100x100xf32>, vector<8x100xf32> -> vector<8x100xf32>
    %c0_3 = arith.constant 0 : index
    %c0_4 = arith.constant 0 : index
    %3 = vector.load %arg3[%c0_3, %c0_4] : memref<1x100xf32, #tpu.memory_space<vmem>>, vector<1x100xf32>
    %4 = vector.broadcast %3 : vector<1x100xf32> to vector<8x100xf32>
    %5 = arith.addf %2, %4 : vector<8x100xf32>
    %c0_5 = arith.constant 0 : index
    %c0_6 = arith.constant 0 : index
    %6 = vector.load %arg4[%c0_5, %c0_6] : memref<8x100xf32, #tpu.memory_space<vmem>>, vector<8x100xf32>
    tpu.vector_store %arg4[%c0_5, %c0_6], %5 {strides = array<i32>} : memref<8x100xf32, #tpu.memory_space<vmem>>, vector<8x100xf32>,
    return
  }
  func.func @transform_0(%arg0: i32) -> (i32, i32) {
    %c0_i32 = arith.constant 0 : i32
    %c0_i32_0 = arith.constant 0 : i32
    return %arg0, %c0_i32 : i32, i32
  }
  func.func @transform_1(%arg0: i32) -> (i32, i32) {
    %c0_i32 = arith.constant 0 : i32
    %c0_i32_0 = arith.constant 0 : i32
    %c0_i32_1 = arith.constant 0 : i32
    return %c0_i32, %c0_i32_0 : i32, i32
  }
  func.func @transform_2(%arg0: i32) -> (i32, i32) {
    %c0_i32 = arith.constant 0 : i32
    %c0_i32_0 = arith.constant 0 : i32
    %c0_i32_1 = arith.constant 0 : i32
    return %c0_i32, %c0_i32_0 : i32, i32
  }
  func.func @transform_3(%arg0: i32) -> (i32, i32) {
    %c0_i32 = arith.constant 0 : i32
    %c0_i32_0 = arith.constant 0 : i32
    return %arg0, %c0_i32 : i32, i32
  }
}

</mosaic_0001>

<llo_original>
// kernel: simple_module_diff.1
$region0: #{simple_module_diff.1}
  #allocation0 [shape = 'u32[]', space=smem, size = 0x4, offset = 0x4, fixed_abs, tag = 'smem constant byte address 0x4 - core index']
  #allocation1 [shape = 'u32[144,128]{1,0:T(1,128)}', space=vmem, size = 0x12000, scoped, tag = 'internal scratch']
  %s0 = inlined_call_operand.vmem [shape: f32[8,100], index: 0, kind: input, shape index: {}]
  %s1 = inlined_call_operand.vmem [shape: f32[100,100], index: 1, kind: input, shape index: {}]
  %s2 = inlined_call_operand.vmem [shape: f32[1,100], index: 2, kind: input, shape index: {}]
  %s3 = inlined_call_operand.hbm [shape: f32[8,100], index: 3, kind: output, shape index: {}]
  %s4 = sld [smem:[#allocation0]]
  $region22: #{simple_module_diff.1} parent=0
    _
  %s6 = ssub.s32 1, %s4
  %s7 = scalar_select 0, %s6, %s4
  $region1: #{simple_module_diff.1} parent=0
    #allocation2 [shape = 'u8[4096]{0}', space=vmem, size = 0x1000, scoped, tag = 'output window, operand 0, single buffered']
    #allocation3 [shape = 's32[1]{0}', space=sflag, size = 0x4, scoped, tag = 'scoped memory for simple_module_diff.1']
    %8 = vsyncpa [#allocation3], 0
    // Predicated region
    $region2: #{simple_module_diff.1} parent=1 // pred_check
      _
    $region3: #{simple_module_diff.1} parent=1 // pred_check_branch
      %10 = sbr.rel (0) target = $region5
    $region4: #{simple_module_diff.1} parent=1 // pred_region
      _
    $region5: #{simple_module_diff.1} parent=1 // pred_fallthru
      _
    // Predicated region
    $region6: #{simple_module_diff.1} parent=1 // pred_check
      _
    $region7: #{simple_module_diff.1} parent=1 // pred_check_branch
      %12 = sbr.rel (0) target = $region9
    $region8: #{simple_module_diff.1} parent=1 // pred_region
      _
    $region9: #{simple_module_diff.1} parent=1 // pred_fallthru
      _
    // Predicated region
    $region10: #{simple_module_diff.1} parent=1 // pred_check
      _
    $region11: #{simple_module_diff.1} parent=1 // pred_check_branch
      %14 = sbr.rel (0) target = $region13
    $region12: #{simple_module_diff.1} parent=1 // pred_region
      _
    $region13: #{simple_module_diff.1} parent=1 // pred_fallthru
      _
    %v15 = vld [vmem:[%s0] sm:$0xff]
    %v16 = vld [vmem:[%s1] sm:$0xff]
    %v17 = vld [vmem:[%s1 + $0x8] sm:$0xff]
    %v18 = vld [vmem:[%s1 + $0x10] sm:$0xff]
    %v19 = vld [vmem:[%s1 + $0x18] sm:$0xff]
    %v20 = vld [vmem:[%s1 + $0x20] sm:$0xff]
    %v21 = vld [vmem:[%s1 + $0x28] sm:$0xff]
    %v22 = vld [vmem:[%s1 + $0x30] sm:$0xff]
    %v23 = vld [vmem:[%s1 + $0x38] sm:$0xff]
    %v24 = vld [vmem:[%s1 + $0x40] sm:$0xff]
    %v25 = vld [vmem:[%s1 + $0x48] sm:$0xff]
    %v26 = vld [vmem:[%s1 + $0x50] sm:$0xff]
    %v27 = vld [vmem:[%s1 + $0x58] sm:$0xff]
    %v28 = vld [vmem:[%s1 + $0x60] sm:$0xf]
    %v29 = vld [vmem:[%s2] sm:$0x1]
    %v31 = vlaneseq
    %v32 = vshrl.u32 %v31, 7
    %v33 = vsub.s32 0, %v32
    %v34 = vrot.slane %v29, %v33
    %vm36 = vcmask 818176
    %v38 = vsel %vm36, %v15, 0
    %vm40 = vcmask 1043456
    %v42 = vsel %vm40, %v28, 0
    %44 = vmatprep.subr.mxu0 0.0
    %45 = vmatpush1.msra.mxu0 0.0
    %46 = vmatprep.subr.mxu0 0.0
    %47 = vmatpush1.msra.mxu0 0.0
    %48 = vmatprep.subr.mxu0 0.0
    %49 = vmatpush1.msra.mxu0 0.0
    %50 = vmatprep.subr.mxu0 0.0
    %51 = vmatpush1.msra.mxu0 %v42
    %52 = vmatprep.subr.mxu0 0.0
    %53 = vmatpush1.msra.mxu0 %v27
    %54 = vmatprep.subr.mxu0 0.0
    %55 = vmatpush1.msra.mxu0 %v26
    %56 = vmatprep.subr.mxu0 0.0
    %57 = vmatpush1.msra.mxu0 %v25
    %58 = vmatprep.subr.mxu0 0.0
    %59 = vmatpush1.msra.mxu0 %v24
    %60 = vmatprep.subr.mxu0 0.0
    %61 = vmatpush1.msra.mxu0 %v23
    %62 = vmatprep.subr.mxu0 0.0
    %63 = vmatpush1.msra.mxu0 %v22
    %64 = vmatprep.subr.mxu0 0.0
    %65 = vmatpush1.msra.mxu0 %v21
    %66 = vmatprep.subr.mxu0 0.0
    %67 = vmatpush1.msra.mxu0 %v20
    %68 = vmatprep.subr.mxu0 0.0
    %69 = vmatpush1.msra.mxu0 %v19
    %70 = vmatprep.subr.mxu0 0.0
    %71 = vmatpush1.msra.mxu0 %v18
    %72 = vmatprep.subr.mxu0 0.0
    %73 = vmatpush1.msra.mxu0 %v17
    %74 = vmatprep.subr.mxu0 0.0
    %75 = vmatpush1.msra.mxu0 %v16
    %76 = vmatprep.subr.mxu0 0.0
    %77 = vmatpush2.msra.mxu0 0.0
    %78 = vmatprep.subr.mxu0 0.0
    %79 = vmatpush2.msra.mxu0 0.0
    %80 = vmatprep.subr.mxu0 0.0
    %81 = vmatpush2.msra.mxu0 0.0
    %82 = vmatprep.subr.mxu0 0.0
    %83 = vmatpush2.msra.mxu0 0.0
    %84 = vmatprep.subr.mxu0 0.0
    %85 = vmatpush2.msra.mxu0 0.0
    %86 = vmatprep.subr.mxu0 0.0
    %87 = vmatpush2.msra.mxu0 0.0
    %88 = vmatprep.subr.mxu0 0.0
    %89 = vmatpush2.msra.mxu0 0.0
    %90 = vmatprep.subr.mxu0 0.0
    %91 = vmatpush2.msra.mxu0 0.0
    %92 = vmatprep.subr.mxu0 0.0
    %93 = vmatpush2.msra.mxu0 0.0
    %94 = vmatprep.subr.mxu0 0.0
    %95 = vmatpush2.msra.mxu0 0.0
    %96 = vmatprep.subr.mxu0 0.0
    %97 = vmatpush2.msra.mxu0 0.0
    %98 = vmatprep.subr.mxu0 0.0
    %99 = vmatpush2.msra.mxu0 0.0
    %100 = vmatprep.subr.mxu0 0.0
    %101 = vmatpush2.msra.mxu0 0.0
    %102 = vmatprep.subr.mxu0 0.0
    %103 = vmatpush2.msra.mxu0 0.0
    %104 = vmatprep.subr.mxu0 0.0
    %105 = vmatpush2.msra.mxu0 0.0
    %106 = vmatprep.subr.mxu0 0.0
    %107 = vmatpush2.msra.mxu0 0.0
    %108 = vmatprep.mubr.f32.mxu0 0.0
    %109 = vmatmul.mubr.f32.gmra.mxu0 %v38
    %v110 = vpop.f32.mrf.mxu0
    %v111 = vadd.f32 %v34, %v110
    %v112 = vpop.f32.mrf.mxu0
    %113 = vdwg.mxu0
    %114 = vst.msk [vmem:[#allocation2] sm:$0xff] %vm36, %v111
    // Predicated region
    $region14: #{simple_module_diff.1} parent=1 // pred_check
      _
    $region15: #{simple_module_diff.1} parent=1 // pred_check_branch
      %116 = sbr.rel (0) target = $region17
    $region16: #{simple_module_diff.1} parent=1 // pred_region
      %s118 = ssub.s32 128, 128
      %119 = vsyncadd [#allocation3], %s118
      %s121 = sshll.u32 [#allocation2], 4
      %s122 = int_to_ptr.vmem [resolvable:$true] %s121
      %124 = dma.vmem_to_hbm [thread:$0]  %s122, 128, %s3, [#allocation3]
    $region17: #{simple_module_diff.1} parent=1 // pred_fallthru
      _
    // Predicated region
    $region18: #{simple_module_diff.1} parent=1 // pred_check
      _
    $region19: #{simple_module_diff.1} parent=1 // pred_check_branch
      %126 = sbr.rel (0) target = $region21
    $region20: #{simple_module_diff.1} parent=1 // pred_region
      %127 = dma.done [#allocation3], 128
    $region21: #{simple_module_diff.1} parent=1 // pred_fallthru
      _
    %128 = vsyncpa [#allocation3], 1

</llo_original>
